<compile_context>
chip_gen: v7x
topology: tpu7x:2x2x1
jax: 0.10.0
libtpu: 0.0.40
codegen_flags: <defaults>
</compile_context>

<pallas_src>
import functools

import jax
import jax.numpy as jnp
from jax.experimental import pallas as pl
from jax.experimental.pallas import tpu as pltpu


def _make_kernel(Cin_p, Cout, KH, KW, padding, W, M_img):
    """Build the fused conv+bias+ReLU kernel for static shape parameters."""
    K_p = KH * KW * Cin_p

    def kernel(x_ref, w_ref, b_ref, m_ref, o_ref):
        # x_ref : (1, Cin_p, L)      flattened halo-padded image (one batch elem)
        # w_ref : (Cout, K_p)        weights, k = (kh*KW + kw)*Cin_p + c (resident)
        # b_ref : (Cout, 1)          bias (resident)
        # m_ref : (KW, M_img)        {0,1} column-validity masks per kw tap (resident)
        # o_ref : (1, Cout, M_img)   output block, M = Ho*Wo on lanes (lane-dense)
        x = x_ref[0]                   # (Cin_p, L)
        m = m_ref[...]                 # (KW, M_img)

        # In-VMEM im2col: each tap (kh, kw) is a contiguous lane slice of the
        # flattened image (valid because Wo == W for 'same' width), with the
        # wrapped W-boundary columns zeroed by the per-kw mask.
        taps = []
        for kh in range(KH):
            for kw in range(KW):
                s = kh * W + kw
                t = x[:, s:s + M_img]                  # (Cin_p, M_img)
                if kw != padding:                      # middle tap needs no mask
                    t = t * m[kw:kw + 1, :]
                taps.append(t)
        p = jnp.concatenate(taps, axis=0)              # (K_p, M_img) patch tile

        # Single MXU GEMM (K folded), bias + ReLU fused in the epilogue.
        acc = jnp.dot(w_ref[...], p, preferred_element_type=jnp.float32)
        acc = acc + b_ref[...]                         # (Cout, M_img) + (Cout, 1)
        o_ref[0] = jnp.maximum(acc, 0.0).astype(o_ref.dtype)

    return kernel


@functools.partial(jax.jit, static_argnames=("stride", "padding", "dilation", "groups"))
def conv_module_forward(x_nchw, weight, bias, *, stride=1, padding=1,
                        dilation=1, groups=1):
    """ConvModule forward: relu(conv2d(x, weight, bias, stride=1, padding=p)).

    x_nchw : (N, Cin, H, W) float32 (PyTorch NCHW convention)
    weight : (Cout, Cin, KH, KW)
    bias   : (Cout,)
    returns (N, Cout, Ho, Wo) in NCHW.
    """
    N, Cin, H, W = x_nchw.shape
    Cout, Cin_w, KH, KW = weight.shape
    assert Cin == Cin_w
    if stride != 1 or dilation != 1 or groups != 1:
        # TODO(synk): general stride/dilation/groups not implemented.
        raise NotImplementedError("only stride=1, dilation=1, groups=1 supported")
    # The contiguous-slice im2col trick requires 'same' width (Wo == W).
    assert 2 * padding == KW - 1, "only 'same'-width convolutions supported"

    dtype = x_nchw.dtype
    itemsize = jnp.dtype(dtype).itemsize

    Hp = H + 2 * padding
    Ho = Hp - KH + 1
    Wo = W
    M_img = Ho * Wo

    # Pad Cin to a sublane multiple so in-kernel tap row-groups are aligned.
    Cin_p = ((Cin + 7) // 8) * 8
    K_p = KH * KW * Cin_p

    # ---- input: keep native NCHW, pad H, flatten spatial, add a `padding`
    # element halo on the flattened axis (covers the H-boundary taps). --------
    x_p = jnp.pad(x_nchw, ((0, 0), (0, Cin_p - Cin), (padding, padding), (0, 0)))
    x_flat = x_p.reshape(N, Cin_p, Hp * W)
    x_flat = jnp.pad(x_flat, ((0, 0), (0, 0), (padding, padding)))
    L = Hp * W + 2 * padding

    # ---- weights as (Cout, K_p): Cout on sublanes, k = (kh*KW+kw)*Cin_p + c --
    w_p = jnp.pad(weight, ((0, 0), (0, Cin_p - Cin), (0, 0), (0, 0)))
    w2 = jnp.transpose(w_p, (0, 2, 3, 1)).reshape(Cout, K_p).astype(dtype)
    b2 = bias.reshape(Cout, 1).astype(jnp.float32)

    # ---- per-kw column-validity masks for the W boundary of the 'same' conv -
    col = jnp.tile(jnp.arange(Wo, dtype=jnp.int32), Ho)          # (M_img,)
    masks = []
    for kw in range(KW):
        shift = kw - padding
        masks.append(((col + shift >= 0) & (col + shift < Wo)).astype(dtype))
    mask = jnp.stack(masks, axis=0)                              # (KW, M_img)

    kernel = _make_kernel(Cin_p, Cout, KH, KW, padding, W, M_img)

    # VMEM sized from the tiles: double-buffered in/out blocks + resident
    # weight/bias/mask + im2col workspace (generous 8x patch tile), >= 4 MiB.
    vmem_bytes = (2 * (Cin_p * L + Cout * M_img) * itemsize
                  + (Cout * K_p + Cout + KW * M_img) * itemsize
                  + 8 * K_p * M_img * itemsize)
    vmem_limit = int(min(max(vmem_bytes, 4 * 1024 * 1024), 32 * 1024 * 1024))

    flops = 2 * N * Cout * K_p * M_img
    bytes_accessed = itemsize * (N * Cin_p * L + Cout * K_p + Cout
                                 + KW * M_img + N * Cout * M_img)

    out_flat = pl.pallas_call(
        kernel,
        out_shape=jax.ShapeDtypeStruct((N, Cout, M_img), dtype),
        grid_spec=pltpu.PrefetchScalarGridSpec(
            num_scalar_prefetch=0,
            grid=(N,),                                    # >=2 parallel steps (v7x megacore)
            in_specs=[
                pl.BlockSpec((1, Cin_p, L), lambda n: (n, 0, 0)),
                pl.BlockSpec((Cout, K_p), lambda n: (0, 0)),    # resident weights
                pl.BlockSpec((Cout, 1), lambda n: (0, 0)),      # resident bias
                pl.BlockSpec((KW, M_img), lambda n: (0, 0)),    # resident masks
            ],
            out_specs=pl.BlockSpec((1, Cout, M_img), lambda n: (n, 0, 0)),
        ),
        compiler_params=pltpu.CompilerParams(
            dimension_semantics=("parallel",),
            vmem_limit_bytes=vmem_limit),
        cost_estimate=pl.CostEstimate(
            flops=flops, transcendentals=0, bytes_accessed=bytes_accessed),
    )(x_flat, w2, b2, mask)

    # (N, Cout, Ho*Wo) -> (N, Cout, Ho, Wo): pure metadata reshape, NCHW output.
    return out_flat.reshape(N, Cout, Ho, Wo)


def _reference(x_nchw, weight, bias, *, padding=1):
    y = jax.lax.conv_general_dilated(
        x_nchw, weight,
        window_strides=(1, 1),
        padding=[(padding, padding), (padding, padding)],
        dimension_numbers=("NCHW", "OIHW", "NCHW"),
    )
    y = y + bias.reshape(1, -1, 1, 1)
    return jnp.maximum(y, 0.0)


if __name__ == "__main__":
    key = jax.random.PRNGKey(0)
    k_x, k_w, _ = jax.random.split(key, 3)

    # ConvModule(in_channels=4, out_channels=8, kernel_size=3, padding=1)
    N, Cin, H, W = 2, 4, 16, 16
    Cout, KH, KW = 8, 3, 3

    x = jax.random.normal(k_x, (N, Cin, H, W), dtype=jnp.float32)
    # Kaiming-style deterministic init (relu gain): std = sqrt(2 / fan_in)
    fan_in = Cin * KH * KW
    weight = jax.random.normal(k_w, (Cout, Cin, KH, KW), dtype=jnp.float32) \
        * jnp.sqrt(2.0 / fan_in)
    bias = 0.01 * jnp.arange(Cout, dtype=jnp.float32)

    out = conv_module_forward(x, weight, bias, padding=1)
    out = jax.block_until_ready(out)

    ref = _reference(x, weight, bias, padding=1)
    assert out.shape == (N, Cout, H, W)
    assert jnp.allclose(out, ref, atol=1e-3, rtol=1e-3), "mismatch vs lax reference"

    print("KERNEL_OK")
</pallas_src>

<mosaic_0001>
module attributes {stable_mosaic.version = 11 : i64} {
  func.func @kernel(%arg0: i32, %arg1: memref<1x8x290xf32, #tpu.memory_space<vmem>>, %arg2: memref<8x72xf32, #tpu.memory_space<vmem>>, %arg3: memref<8x1xf32, #tpu.memory_space<vmem>>, %arg4: memref<3x256xf32, #tpu.memory_space<vmem>>, %arg5: memref<1x8x256xf32, #tpu.memory_space<vmem>>) attributes {dimension_semantics = [#tpu.dimension_semantics<parallel>], iteration_bounds = array<i64: 2>, scalar_prefetch = 0 : i64, scratch_operands = 0 : i64, tpu.core_type = #tpu.core_type<tc>, window_params = [{transform_indices = @transform_0, window_bounds = array<i64: 1, 8, 290>}, {pipeline_mode = #tpu.pipeline_mode<synchronous>, transform_indices = @transform_1, window_bounds = array<i64: 8, 72>}, {pipeline_mode = #tpu.pipeline_mode<synchronous>, transform_indices = @transform_2, window_bounds = array<i64: 8, 1>}, {pipeline_mode = #tpu.pipeline_mode<synchronous>, transform_indices = @transform_3, window_bounds = array<i64: 3, 256>}, {transform_indices = @transform_4, window_bounds = array<i64: 1, 8, 256>}]} {
    %c0 = arith.constant 0 : index
    %c0_0 = arith.constant 0 : index
    %c0_1 = arith.constant 0 : index
    %0 = vector.load %arg1[%c0, %c0_0, %c0_1] : memref<1x8x290xf32, #tpu.memory_space<vmem>>, vector<1x8x290xf32>
    %1 = vector.shape_cast %0 : vector<1x8x290xf32> to vector<8x290xf32>
    %c0_2 = arith.constant 0 : index
    %c0_3 = arith.constant 0 : index
    %2 = vector.load %arg4[%c0_2, %c0_3] : memref<3x256xf32, #tpu.memory_space<vmem>>, vector<3x256xf32>
    %3 = vector.extract_strided_slice %1 {offsets = [0, 0], sizes = [8, 256], strides = [1, 1]} : vector<8x290xf32> to vector<8x256xf32>
    %4 = vector.extract_strided_slice %2 {offsets = [0, 0], sizes = [1, 256], strides = [1, 1]} : vector<3x256xf32> to vector<1x256xf32>
    %5 = vector.broadcast %4 : vector<1x256xf32> to vector<8x256xf32>
    %6 = arith.mulf %3, %5 : vector<8x256xf32>
    %7 = vector.extract_strided_slice %1 {offsets = [0, 1], sizes = [8, 256], strides = [1, 1]} : vector<8x290xf32> to vector<8x256xf32>
    %8 = vector.extract_strided_slice %1 {offsets = [0, 2], sizes = [8, 256], strides = [1, 1]} : vector<8x290xf32> to vector<8x256xf32>
    %9 = vector.extract_strided_slice %2 {offsets = [2, 0], sizes = [1, 256], strides = [1, 1]} : vector<3x256xf32> to vector<1x256xf32>
    %10 = vector.broadcast %9 : vector<1x256xf32> to vector<8x256xf32>
    %11 = arith.mulf %8, %10 : vector<8x256xf32>
    %12 = vector.extract_strided_slice %1 {offsets = [0, 16], sizes = [8, 256], strides = [1, 1]} : vector<8x290xf32> to vector<8x256xf32>
    %13 = vector.extract_strided_slice %2 {offsets = [0, 0], sizes = [1, 256], strides = [1, 1]} : vector<3x256xf32> to vector<1x256xf32>
    %14 = vector.broadcast %13 : vector<1x256xf32> to vector<8x256xf32>
    %15 = arith.mulf %12, %14 : vector<8x256xf32>
    %16 = vector.extract_strided_slice %1 {offsets = [0, 17], sizes = [8, 256], strides = [1, 1]} : vector<8x290xf32> to vector<8x256xf32>
    %17 = vector.extract_strided_slice %1 {offsets = [0, 18], sizes = [8, 256], strides = [1, 1]} : vector<8x290xf32> to vector<8x256xf32>
    %18 = vector.extract_strided_slice %2 {offsets = [2, 0], sizes = [1, 256], strides = [1, 1]} : vector<3x256xf32> to vector<1x256xf32>
    %19 = vector.broadcast %18 : vector<1x256xf32> to vector<8x256xf32>
    %20 = arith.mulf %17, %19 : vector<8x256xf32>
    %21 = vector.extract_strided_slice %1 {offsets = [0, 32], sizes = [8, 256], strides = [1, 1]} : vector<8x290xf32> to vector<8x256xf32>
    %22 = vector.extract_strided_slice %2 {offsets = [0, 0], sizes = [1, 256], strides = [1, 1]} : vector<3x256xf32> to vector<1x256xf32>
    %23 = vector.broadcast %22 : vector<1x256xf32> to vector<8x256xf32>
    %24 = arith.mulf %21, %23 : vector<8x256xf32>
    %25 = vector.extract_strided_slice %1 {offsets = [0, 33], sizes = [8, 256], strides = [1, 1]} : vector<8x290xf32> to vector<8x256xf32>
    %26 = vector.extract_strided_slice %1 {offsets = [0, 34], sizes = [8, 256], strides = [1, 1]} : vector<8x290xf32> to vector<8x256xf32>
    %27 = vector.extract_strided_slice %2 {offsets = [2, 0], sizes = [1, 256], strides = [1, 1]} : vector<3x256xf32> to vector<1x256xf32>
    %28 = vector.broadcast %27 : vector<1x256xf32> to vector<8x256xf32>
    %29 = arith.mulf %26, %28 : vector<8x256xf32>
    %30 = tpu.concatenate %6, %7, %11, %15, %16, %20, %24, %25, %29 in 0 : vector<8x256xf32>, vector<8x256xf32>, vector<8x256xf32>, vector<8x256xf32>, vector<8x256xf32>, vector<8x256xf32>, vector<8x256xf32>, vector<8x256xf32>, vector<8x256xf32> -> vector<72x256xf32>
    %c0_4 = arith.constant 0 : index
    %c0_5 = arith.constant 0 : index
    %31 = vector.load %arg2[%c0_4, %c0_5] : memref<8x72xf32, #tpu.memory_space<vmem>>, vector<8x72xf32>
    %cst = arith.constant dense<0.000000e+00> : vector<8x256xf32>
    %32 = tpu.matmul %31, %30, %cst {dimension_numbers = #tpu.dot_dimension_numbers<[1], [0], [0], [1], [0, 0, 1, 1], [], []>} : vector<8x72xf32>, vector<72x256xf32>, vector<8x256xf32> -> vector<8x256xf32>
    %c0_6 = arith.constant 0 : index
    %c0_7 = arith.constant 0 : index
    %33 = vector.load %arg3[%c0_6, %c0_7] : memref<8x1xf32, #tpu.memory_space<vmem>>, vector<8x1xf32>
    %34 = vector.broadcast %33 : vector<8x1xf32> to vector<8x256xf32>
    %35 = arith.addf %32, %34 : vector<8x256xf32>
    %cst_8 = arith.constant 0.000000e+00 : f32
    %36 = vector.broadcast %cst_8 : f32 to vector<8x256xf32>
    %37 = arith.maximumf %35, %36 : vector<8x256xf32>
    %c0_9 = arith.constant 0 : index
    %c0_10 = arith.constant 0 : index
    %c0_11 = arith.constant 0 : index
    %38 = vector.load %arg5[%c0_9, %c0_10, %c0_11] : memref<1x8x256xf32, #tpu.memory_space<vmem>>, vector<1x8x256xf32>
    %39 = vector.shape_cast %38 : vector<1x8x256xf32> to vector<8x256xf32>
    %40 = vector.shape_cast %37 : vector<8x256xf32> to vector<1x8x256xf32>
    tpu.vector_store %arg5[%c0_9, %c0_10, %c0_11], %40 {strides = array<i32>} : memref<1x8x256xf32, #tpu.memory_space<vmem>>, vector<1x8x256xf32>,
    return
  }
  func.func @transform_0(%arg0: i32) -> (i32, i32, i32) {
    %c0_i32 = arith.constant 0 : i32
    %c0_i32_0 = arith.constant 0 : i32
    %c0_i32_1 = arith.constant 0 : i32
    return %arg0, %c0_i32, %c0_i32_0 : i32, i32, i32
  }
  func.func @transform_1(%arg0: i32) -> (i32, i32) {
    %c0_i32 = arith.constant 0 : i32
    %c0_i32_0 = arith.constant 0 : i32
    %c0_i32_1 = arith.constant 0 : i32
    return %c0_i32, %c0_i32_0 : i32, i32
  }
  func.func @transform_2(%arg0: i32) -> (i32, i32) {
    %c0_i32 = arith.constant 0 : i32
    %c0_i32_0 = arith.constant 0 : i32
    %c0_i32_1 = arith.constant 0 : i32
    return %c0_i32, %c0_i32_0 : i32, i32
  }
  func.func @transform_3(%arg0: i32) -> (i32, i32) {
    %c0_i32 = arith.constant 0 : i32
    %c0_i32_0 = arith.constant 0 : i32
    %c0_i32_1 = arith.constant 0 : i32
    return %c0_i32, %c0_i32_0 : i32, i32
  }
  func.func @transform_4(%arg0: i32) -> (i32, i32, i32) {
    %c0_i32 = arith.constant 0 : i32
    %c0_i32_0 = arith.constant 0 : i32
    %c0_i32_1 = arith.constant 0 : i32
    return %arg0, %c0_i32, %c0_i32_0 : i32, i32, i32
  }
}

</mosaic_0001>

<llo_original>
// kernel: conv_module_forward.1
$region0: #{conv_module_forward.1}
  #allocation0 [shape = 'u32[]', space=smem, size = 0x4, offset = 0x4, fixed_abs, tag = 'smem constant byte address 0x4 - core index']
  #allocation1 [shape = 'u32[144,128]{1,0:T(1,128)}', space=vmem, size = 0x12000, scoped, tag = 'internal scratch']
  %s0 = inlined_call_operand.vmem [shape: f32[2,8,290], index: 0, kind: input, shape index: {}]
  %s1 = inlined_call_operand.vmem [shape: f32[8,72], index: 1, kind: input, shape index: {}]
  %s2 = inlined_call_operand.vmem [shape: f32[8,1], index: 2, kind: input, shape index: {}]
  %s3 = inlined_call_operand.vmem [shape: f32[3,256], index: 3, kind: input, shape index: {}]
  %s4 = inlined_call_operand.vmem [shape: f32[2,8,256], index: 4, kind: output, shape index: {}]
  %s5 = sld [smem:[#allocation0]]
  $region49: #{conv_module_forward.1} parent=0
    _
  %s7 = ssub.s32 1, %s5
  %s8 = scalar_select 0, %s7, %s5
  loop: start=0, step=1, limit=4
  $region2: #{conv_module_forward.1} parent=0 // loop_pre_header
    _
  $region3: #{conv_module_forward.1} parent=0 // loop_header
    %s10 = sphi 0, %s14
    %p11 = scmp.ge.s32.totalorder %s10, 4
    %s20 = sphi 0, %s22
    %s23 = sphi 0, %s20
    %s24 = sphi 0, %s23
    %s40 = sphi 0, %s24
    %s44 = sphi 0, %s44
    %s46 = sphi 0, %s44
    %s47 = sphi 0, %s46
    %s61 = sphi 0, %s47
    %s65 = sphi 0, %s65
    %s67 = sphi 0, %s65
    %s68 = sphi 0, %s67
    %s82 = sphi 0, %s68
    %s86 = sphi 0, %s86
    %s88 = sphi 0, %s86
    %s89 = sphi 0, %s88
    %s103 = sphi 0, %s89
    %s109 = sphi 0, %s111
    %s112 = sphi 0, %s109
    %s113 = sphi 0, %s112
    %s129 = sphi 0, %s113
  $region4: #{conv_module_forward.1} parent=0 // loop_header_branch
    %13 = sbr.rel (%p11) target = $region8
  $region5: #{conv_module_forward.1} parent=0 // loop_body
    %s15 = ssub.s32 %s10, 1
    %s16 = ssub.s32 %s10, 2
    %s17 = sadd.s32 %s10, 1
    %s18 = ssub.s32 %s10, %s17
    %p19 = scmp.eq.s32.totalorder %s18, 0
    %s21 = sadd.s32 %s20, 1
    %s22 = scalar_select %p19, %s20, %s21
    %p25 = pneg %p19
    %p26 = scmp.eq.s32.totalorder %s10, 1
    %p27 = por %p25, %p26
    %p28 = scmp.ne.s32.totalorder %s20, %s23
    %p29 = scmp.eq.s32.totalorder %s10, 0
    %p30 = por %p28, %p29
    %p31 = scmp.ne.s32.totalorder %s20, %s23
    %p32 = scmp.eq.s32.totalorder %s15, 1
    %p33 = por %p31, %p32
    %p34 = scmp.ne.s32.totalorder %s23, %s24
    %p35 = scmp.eq.s32.totalorder %s15, 0
    %p36 = por %p34, %p35
    %p37 = scmp.ne.s32.totalorder %s23, %s24
    %p38 = scmp.eq.s32.totalorder %s16, 1
    %p39 = por %p37, %p38
    %p41 = scmp.ne.s32.totalorder %s24, %s40
    %p42 = scmp.eq.s32.totalorder %s16, 0
    %p43 = por %p41, %p42
    %s45 = sadd.s32 %s44, 1
    %p48 = scmp.eq.s32.totalorder %s10, 1
    %p49 = scmp.ne.s32.totalorder %s44, %s46
    %p50 = scmp.eq.s32.totalorder %s10, 0
    %p51 = por %p49, %p50
    %p52 = scmp.ne.s32.totalorder %s44, %s46
    %p53 = scmp.eq.s32.totalorder %s15, 1
    %p54 = por %p52, %p53
    %p55 = scmp.ne.s32.totalorder %s46, %s47
    %p56 = scmp.eq.s32.totalorder %s15, 0
    %p57 = por %p55, %p56
    %p58 = scmp.ne.s32.totalorder %s46, %s47
    %p59 = scmp.eq.s32.totalorder %s16, 1
    %p60 = por %p58, %p59
    %p62 = scmp.ne.s32.totalorder %s47, %s61
    %p63 = scmp.eq.s32.totalorder %s16, 0
    %p64 = por %p62, %p63
    %s66 = sadd.s32 %s65, 1
    %p69 = scmp.eq.s32.totalorder %s10, 1
    %p70 = scmp.ne.s32.totalorder %s65, %s67
    %p71 = scmp.eq.s32.totalorder %s10, 0
    %p72 = por %p70, %p71
    %p73 = scmp.ne.s32.totalorder %s65, %s67
    %p74 = scmp.eq.s32.totalorder %s15, 1
    %p75 = por %p73, %p74
    %p76 = scmp.ne.s32.totalorder %s67, %s68
    %p77 = scmp.eq.s32.totalorder %s15, 0
    %p78 = por %p76, %p77
    %p79 = scmp.ne.s32.totalorder %s67, %s68
    %p80 = scmp.eq.s32.totalorder %s16, 1
    %p81 = por %p79, %p80
    %p83 = scmp.ne.s32.totalorder %s68, %s82
    %p84 = scmp.eq.s32.totalorder %s16, 0
    %p85 = por %p83, %p84
    %s87 = sadd.s32 %s86, 1
    %p90 = scmp.eq.s32.totalorder %s10, 1
    %p91 = scmp.ne.s32.totalorder %s86, %s88
    %p92 = scmp.eq.s32.totalorder %s10, 0
    %p93 = por %p91, %p92
    %p94 = scmp.ne.s32.totalorder %s86, %s88
    %p95 = scmp.eq.s32.totalorder %s15, 1
    %p96 = por %p94, %p95
    %p97 = scmp.ne.s32.totalorder %s88, %s89
    %p98 = scmp.eq.s32.totalorder %s15, 0
    %p99 = por %p97, %p98
    %p100 = scmp.ne.s32.totalorder %s88, %s89
    %p101 = scmp.eq.s32.totalorder %s16, 1
    %p102 = por %p100, %p101
    %p104 = scmp.ne.s32.totalorder %s89, %s103
    %p105 = scmp.eq.s32.totalorder %s16, 0
    %p106 = por %p104, %p105
    %s107 = ssub.s32 %s10, %s17
    %p108 = scmp.eq.s32.totalorder %s107, 0
    %s110 = sadd.s32 %s109, 1
    %s111 = scalar_select %p108, %s109, %s110
    %p114 = pneg %p108
    %p115 = scmp.eq.s32.totalorder %s10, 1
    %p116 = por %p114, %p115
    %p117 = scmp.ne.s32.totalorder %s109, %s112
    %p118 = scmp.eq.s32.totalorder %s10, 0
    %p119 = por %p117, %p118
    %p120 = scmp.ne.s32.totalorder %s109, %s112
    %p121 = scmp.eq.s32.totalorder %s15, 1
    %p122 = por %p120, %p121
    %p123 = scmp.ne.s32.totalorder %s112, %s113
    %p124 = scmp.eq.s32.totalorder %s15, 0
    %p125 = por %p123, %p124
    %p126 = scmp.ne.s32.totalorder %s112, %s113
    %p127 = scmp.eq.s32.totalorder %s16, 1
    %p128 = por %p126, %p127
    %p130 = scmp.ne.s32.totalorder %s113, %s129
    %p131 = scmp.eq.s32.totalorder %s16, 0
    %p132 = por %p130, %p131
    %p133 = scmp.le.s32.totalorder 1, %s10
    %p134 = scmp.lt.s32.totalorder %s10, 3
    %p135 = pnand %p133, %p134
    %p136 = pneg %p135
    // Predicated region
    $region9: #{conv_module_forward.1} parent=5 // pred_check
      _
    $region10: #{conv_module_forward.1} parent=5 // pred_check_branch
      %138 = sbr.rel (%p135) target = $region12
    $region11: #{conv_module_forward.1} parent=5 // pred_region
      %s139 = ssub.s32 %s10, 1
      // Predicated region
      $region13: #{conv_module_forward.1} parent=11 // pred_check
        %p140 = pneg %p57
      $region14: #{conv_module_forward.1} parent=11 // pred_check_branch
        %142 = sbr.rel (%p140) target = $region16
      $region15: #{conv_module_forward.1} parent=11 // pred_region
        _
      $region16: #{conv_module_forward.1} parent=11 // pred_fallthru
        _
      // Predicated region
      $region17: #{conv_module_forward.1} parent=11 // pred_check
        %p143 = pneg %p78
      $region18: #{conv_module_forward.1} parent=11 // pred_check_branch
        %145 = sbr.rel (%p143) target = $region20
      $region19: #{conv_module_forward.1} parent=11 // pred_region
        _
      $region20: #{conv_module_forward.1} parent=11 // pred_fallthru
        _
      // Predicated region
      $region21: #{conv_module_forward.1} parent=11 // pred_check
        %p146 = pneg %p99
      $region22: #{conv_module_forward.1} parent=11 // pred_check_branch
        %148 = sbr.rel (%p146) target = $region24
      $region23: #{conv_module_forward.1} parent=11 // pred_region
        _
      $region24: #{conv_module_forward.1} parent=11 // pred_fallthru
        _
    $region12: #{conv_module_forward.1} parent=5 // pred_fallthru
      _
    %p149 = scmp.lt.s32.totalorder %s10, 2
    // Predicated region
    $region25: #{conv_module_forward.1} parent=5 // pred_check
      %p150 = pneg %p149
    $region26: #{conv_module_forward.1} parent=5 // pred_check_branch
      %152 = sbr.rel (%p150) target = $region28
    $region27: #{conv_module_forward.1} parent=5 // pred_region
      // Predicated region
      $region29: #{conv_module_forward.1} parent=27 // pred_check
        %p153 = pneg %p30
      $region30: #{conv_module_forward.1} parent=27 // pred_check_branch
        %155 = sbr.rel (%p153) target = $region32
      $region31: #{conv_module_forward.1} parent=27 // pred_region
        %p156 = scmp.lt.s32.totalorder %s10, 1
        %s157 = scalar_select %p156, %s10, 1
        %s158 = smul.addr %s157, 3
        %s159 = smul.addr %s158, 8
        %s160 = scalar_lea.vmem %s0, %s159
      $region32: #{conv_module_forward.1} parent=27 // pred_fallthru
        _
    $region28: #{conv_module_forward.1} parent=5 // pred_fallthru
      _
    %p161 = scmp.le.s32.totalorder 1, %s10
    %p162 = scmp.lt.s32.totalorder %s10, 3
    %p163 = pnand %p161, %p162
    %p164 = pneg %p163
    // Predicated region
    $region33: #{conv_module_forward.1} parent=5 // pred_check
      _
    $region34: #{conv_module_forward.1} parent=5 // pred_check_branch
      %166 = sbr.rel (%p163) target = $region36
    $region35: #{conv_module_forward.1} parent=5 // pred_region
      %s167 = ssub.s32 %s10, 1
      %p168 = scmp.lt.s32.totalorder %s15, 1
      %s169 = scalar_select %p168, %s15, 1
      %s170 = smul.addr %s169, 3
      %s171 = smul.addr %s170, 8
      %s172 = scalar_lea.vmem %s0, %s171
      %p173 = pneg %p36
      %p174 = pneg %p33
      %p175 = pneg %p57
      %p176 = pneg %p54
      %p177 = pneg %p78
      %p178 = pneg %p75
      %p179 = pneg %p99
      %p180 = pneg %p96
      %p181 = pneg %p125
      %p182 = pneg %p122
      %p183 = scmp.lt.s32.totalorder %s15, 1
      %s184 = scalar_select %p183, %s15, 1
      %s185 = smul.addr %s184, 2
      %s186 = smul.addr %s185, 8
      %s187 = scalar_lea.vmem %s4, %s186
      %p188 = scmp.lt.s32.totalorder %s15, 1
      %s189 = scalar_select %p188, %s15, 1
      %s190 = smul.addr %s189, 3
      %s191 = smul.addr %s190, 8
      %s192 = scalar_lea.vmem %s0, %s191
      %p193 = scmp.lt.s32.totalorder %s15, 1
      %s194 = scalar_select %p193, %s15, 1
      %s195 = smul.addr %s194, 2
      %s196 = smul.addr %s195, 8
      %s197 = scalar_lea.vmem %s4, %s196
      %v198 = vld [vmem:[%s192] sm:$0xff]
      %v199 = vld [vmem:[%s192 + $0x8] sm:$0xff]
      %v200 = vld [vmem:[%s192 + $0x10] sm:$0xff]
      %v201 = vld [vmem:[%s3] sm:$0x77]
      %v203 = vlaneseq
      %v204 = vshrl.u32 %v203, 7
      %v205 = vsub.s32 0, %v204
      %v206 = vrot.slane %v201, %v205
      %v207 = vlaneseq
      %v208 = vshrl.u32 %v207, 7
      %v209 = vsub.s32 4, %v208
      %v210 = vrot.slane %v201, %v209
      %v213 = vlaneseq
      %v214 = vshrl.u32 %v213, 7
      %v215 = vsub.s32 0, %v214
      %v216 = vrot.slane %v206, %v215
      %v217 = vlaneseq
      %v218 = vshrl.u32 %v217, 7
      %v219 = vsub.s32 0, %v218
      %v220 = vrot.slane %v210, %v219
      %v221 = vmul.f32 %v198, %v216
      %v222 = vmul.f32 %v199, %v220
      %v223 = vlaneseq
      %v224 = vshrl.u32 %v223, 7
      %v225 = vsub.s32 2, %v224
      %v226 = vrot.slane %v201, %v225
      %v227 = vlaneseq
      %v228 = vshrl.u32 %v227, 7
      %v229 = vsub.s32 6, %v228
      %v230 = vrot.slane %v201, %v229
      %v233 = vlaneseq
      %v234 = vshrl.u32 %v233, 7
      %v235 = vsub.s32 2, %v234
      %v236 = vrot.slane %v226, %v235
      %v237 = vlaneseq
      %v238 = vshrl.u32 %v237, 7
      %v239 = vsub.s32 2, %v238
      %v240 = vrot.slane %v230, %v239
      %243 = vrot.lane.b32.xlu0 %v236, 2
      %v244 = vpop.permute.xlu0 %243
      %245 = vrot.lane.b32.xlu0 %v240, 2
      %v246 = vpop.permute.xlu0 %245
      %vm247 = vcmask 15360
      %v248 = vsel %vm247, %v244, %v246
      %v252 = vmul.f32 %v198, %v244
      %v253 = vmul.f32 %v199, %v248
      %v254 = vmul.f32 %v200, %v246
      %257 = vrot.lane.b32.xlu0 %v216, 16
      %v258 = vpop.permute.xlu0 %257
      %259 = vrot.lane.b32.xlu0 %v220, 16
      %v260 = vpop.permute.xlu0 %259
      %vm261 = vcmask 130048
      %v262 = vsel %vm261, %v258, %v260
      %v266 = vmul.f32 %v198, %v258
      %v267 = vmul.f32 %v199, %v262
      %v268 = vmul.f32 %v200, %v260
      %269 = vrot.lane.b32.xlu0 %v236, 18
      %v270 = vpop.permute.xlu0 %269
      %271 = vrot.lane.b32.xlu0 %v240, 18
      %v272 = vpop.permute.xlu0 %271
      %vm273 = vcmask 146432
      %v274 = vsel %vm273, %v270, %v272
      %v278 = vmul.f32 %v198, %v270
      %v279 = vmul.f32 %v199, %v274
      %v280 = vmul.f32 %v200, %v272
      %281 = vrot.lane.b32.xlu0 %v216, 32
      %v282 = vpop.permute.xlu0 %281
      %283 = vrot.lane.b32.xlu0 %v220, 32
      %v284 = vpop.permute.xlu0 %283
      %vm285 = vcmask 261120
      %v286 = vsel %vm285, %v282, %v284
      %v290 = vmul.f32 %v198, %v282
      %v291 = vmul.f32 %v199, %v286
      %v292 = vmul.f32 %v200, %v284
      %293 = vrot.lane.b32.xlu0 %v236, 34
      %v294 = vpop.permute.xlu0 %293
      %295 = vrot.lane.b32.xlu0 %v240, 34
      %v296 = vpop.permute.xlu0 %295
      %vm297 = vcmask 277504
      %v298 = vsel %vm297, %v294, %v296
      %v302 = vmul.f32 %v198, %v294
      %v303 = vmul.f32 %v199, %v298
      %v304 = vmul.f32 %v200, %v296
      %308 = vrot.lane.b32.xlu0 %v198, 127
      %v309 = vpop.permute.xlu0 %308
      %310 = vrot.lane.b32.xlu0 %v199, 127
      %v311 = vpop.permute.xlu0 %310
      %312 = vrot.lane.b32.xlu0 %v200, 127
      %v313 = vpop.permute.xlu0 %312
      %vm314 = vcmask 1039360
      %v315 = vsel %vm314, %v309, %v311
      %v316 = vsel %vm314, %v311, %v313
      %322 = vrot.lane.b32.xlu0 %v252, 126
      %v323 = vpop.permute.xlu0 %322
      %324 = vrot.lane.b32.xlu0 %v253, 126
      %v325 = vpop.permute.xlu0 %324
      %326 = vrot.lane.b32.xlu0 %v254, 126
      %v327 = vpop.permute.xlu0 %326
      %vm328 = vcmask 1031168
      %v329 = vsel %vm328, %v323, %v325
      %v330 = vsel %vm328, %v325, %v327
      %336 = vrot.lane.b32.xlu0 %v266, 112
      %v337 = vpop.permute.xlu0 %336
      %338 = vrot.lane.b32.xlu0 %v267, 112
      %v339 = vpop.permute.xlu0 %338
      %340 = vrot.lane.b32.xlu0 %v268, 112
      %v341 = vpop.permute.xlu0 %340
      %vm342 = vcmask 916480
      %v343 = vsel %vm342, %v337, %v339
      %v344 = vsel %vm342, %v339, %v341
      %347 = vrot.lane.b32.xlu0 %v198, 111
      %v348 = vpop.permute.xlu0 %347
      %349 = vrot.lane.b32.xlu0 %v199, 111
      %v350 = vpop.permute.xlu0 %349
      %351 = vrot.lane.b32.xlu0 %v200, 111
      %v352 = vpop.permute.xlu0 %351
      %vm353 = vcmask 908288
      %v354 = vsel %vm353, %v348, %v350
      %v355 = vsel %vm353, %v350, %v352
      %361 = vrot.lane.b32.xlu0 %v278, 110
      %v362 = vpop.permute.xlu0 %361
      %363 = vrot.lane.b32.xlu0 %v279, 110
      %v364 = vpop.permute.xlu0 %363
      %365 = vrot.lane.b32.xlu0 %v280, 110
      %v366 = vpop.permute.xlu0 %365
      %vm367 = vcmask 900096
      %v368 = vsel %vm367, %v362, %v364
      %v369 = vsel %vm367, %v364, %v366
      %375 = vrot.lane.b32.xlu0 %v290, 96
      %v376 = vpop.permute.xlu0 %375
      %377 = vrot.lane.b32.xlu0 %v291, 96
      %v378 = vpop.permute.xlu0 %377
      %379 = vrot.lane.b32.xlu0 %v292, 96
      %v380 = vpop.permute.xlu0 %379
      %vm381 = vcmask 785408
      %v382 = vsel %vm381, %v376, %v378
      %v383 = vsel %vm381, %v378, %v380
      %386 = vrot.lane.b32.xlu0 %v198, 95
      %v387 = vpop.permute.xlu0 %386
      %388 = vrot.lane.b32.xlu0 %v199, 95
      %v389 = vpop.permute.xlu0 %388
      %390 = vrot.lane.b32.xlu0 %v200, 95
      %v391 = vpop.permute.xlu0 %390
      %vm392 = vcmask 777216
      %v393 = vsel %vm392, %v387, %v389
      %v394 = vsel %vm392, %v389, %v391
      %400 = vrot.lane.b32.xlu0 %v302, 94
      %v401 = vpop.permute.xlu0 %400
      %402 = vrot.lane.b32.xlu0 %v303, 94
      %v403 = vpop.permute.xlu0 %402
      %404 = vrot.lane.b32.xlu0 %v304, 94
      %v405 = vpop.permute.xlu0 %404
      %vm406 = vcmask 769024
      %v407 = vsel %vm406, %v401, %v403
      %v408 = vsel %vm406, %v403, %v405
      %v411 = vld [vmem:[%s1] sm:$0xff]
      %v412 = vld [vmem:[%s2] sm:$0xff]
      %414 = vset.pattern.permute.xlu0 0
      %415 = vperm.xlu0 %414, %v412
      %v416 = vpop.permute.xlu0 %415
      %vm418 = vcmask 588800
      %v420 = vsel %vm418, %v411, 0
      %422 = vmatprep.subr.mxu0 %v222
      %423 = vmatpush1.msra.mxu0 %v221
      %424 = vmatprep.subr.mxu0 %v316
      %425 = vmatpush1.msra.mxu0 %v315
      %426 = vmatprep.subr.mxu0 %v330
      %427 = vmatpush1.msra.mxu0 %v329
      %428 = vmatprep.subr.mxu0 %v344
      %429 = vmatpush1.msra.mxu0 %v343
      %430 = vmatprep.subr.mxu0 %v355
      %431 = vmatpush1.msra.mxu0 %v354
      %432 = vmatprep.subr.mxu0 %v369
      %433 = vmatpush1.msra.mxu0 %v368
      %434 = vmatprep.subr.mxu0 %v383
      %435 = vmatpush1.msra.mxu0 %v382
      %436 = vmatprep.subr.mxu0 %v394
      %437 = vmatpush1.msra.mxu0 %v393
      %438 = vmatprep.subr.mxu0 %v408
      %439 = vmatpush1.msra.mxu0 %v407
      %440 = vmatprep.subr.mxu0 0.0
      %441 = vmatpush1.msra.mxu0 0.0
      %442 = vmatprep.subr.mxu0 0.0
      %443 = vmatpush1.msra.mxu0 0.0
      %444 = vmatprep.subr.mxu0 0.0
      %445 = vmatpush1.msra.mxu0 0.0
      %446 = vmatprep.subr.mxu0 0.0
      %447 = vmatpush1.msra.mxu0 0.0
      %448 = vmatprep.subr.mxu0 0.0
      %449 = vmatpush1.msra.mxu0 0.0
      %450 = vmatprep.subr.mxu0 0.0
      %451 = vmatpush1.msra.mxu0 0.0
      %452 = vmatprep.subr.mxu0 0.0
      %453 = vmatpush1.msra.mxu0 0.0
      %454 = vmatprep.subr.mxu0 0.0
      %455 = vmatpush1.msra.mxu0 0.0
      %456 = vmatprep.subr.mxu0 0.0
      %457 = vmatpush1.msra.mxu0 0.0
      %458 = vmatprep.subr.mxu0 0.0
      %459 = vmatpush1.msra.mxu0 0.0
      %460 = vmatprep.subr.mxu0 0.0
      %461 = vmatpush1.msra.mxu0 0.0
      %462 = vmatprep.subr.mxu0 0.0
      %463 = vmatpush1.msra.mxu0 0.0
      %464 = vmatprep.subr.mxu0 0.0
      %465 = vmatpush1.msra.mxu0 0.0
      %466 = vmatprep.subr.mxu0 0.0
      %467 = vmatpush1.msra.mxu0 0.0
      %468 = vmatprep.subr.mxu0 0.0
      %469 = vmatpush1.msra.mxu0 0.0
      %470 = vmatprep.subr.mxu0 0.0
      %471 = vmatpush1.msra.mxu0 0.0
      %472 = vmatprep.subr.mxu0 0.0
      %473 = vmatpush1.msra.mxu0 0.0
      %474 = vmatprep.subr.mxu0 0.0
      %475 = vmatpush1.msra.mxu0 0.0
      %476 = vmatprep.subr.mxu0 0.0
      %477 = vmatpush1.msra.mxu0 0.0
      %478 = vmatprep.subr.mxu0 0.0
      %479 = vmatpush1.msra.mxu0 0.0
      %480 = vmatprep.subr.mxu0 0.0
      %481 = vmatpush1.msra.mxu0 0.0
      %482 = vmatprep.subr.mxu0 0.0
      %483 = vmatpush1.msra.mxu0 0.0
      %484 = vmatprep.subr.mxu0 0.0
      %485 = vmatpush1.msra.mxu0 0.0
      %486 = vmatprep.mubr.f32.mxu0 0.0
      %487 = vmatmul.mubr.f32.gmra.mrb[0].mxu0 %v420
      %v488 = vpop.f32.mrb[0].mxu0
      %v489 = vadd.f32 %v416, %v488
      %v490 = vpop.f32.mrb[0].mxu0
      %v491 = vadd.f32 %v416, %v490
      %492 = vdwg.mxu0
      %v493 = vmax.f32 %v489, 0.0
      %v494 = vmax.f32 %v491, 0.0
      %495 = vst [vmem:[%s197] sm:$0xff] %v493
      %496 = vst [vmem:[%s197 + $0x8] sm:$0xff] %v494
      %p497 = scmp.lt.s32.totalorder %s15, 1
      %s498 = scalar_select %p497, %s15, 1
      %s499 = smul.addr %s498, 2
      %s500 = smul.addr %s499, 8
      %s501 = scalar_lea.vmem %s4, %s500
      // Predicated region
      $region37: #{conv_module_forward.1} parent=35 // pred_check
        %p502 = pneg %p122
      $region38: #{conv_module_forward.1} parent=35 // pred_check_branch
        %504 = sbr.rel (%p502) target = $region40
      $region39: #{conv_module_forward.1} parent=35 // pred_region
        _
      $region40: #{conv_module_forward.1} parent=35 // pred_fallthru
        _
    $region36: #{conv_module_forward.1} parent=5 // pred_fallthru
      _
    %p505 = scmp.le.s32.totalorder 2, %s10
    // Predicated region
    $region41: #{conv_module_forward.1} parent=5 // pred_check
      %p506 = pneg %p505
    $region42: #{conv_module_forward.1} parent=5 // pred_check_branch
      %508 = sbr.rel (%p506) target = $region44
    $region43: #{conv_module_forward.1} parent=5 // pred_region
      %s509 = ssub.s32 %s10, 2
      // Predicated region
      $region45: #{conv_module_forward.1} parent=43 // pred_check
        %p510 = pneg %p128
      $region46: #{conv_module_forward.1} parent=43 // pred_check_branch
        %512 = sbr.rel (%p510) target = $region48
      $region47: #{conv_module_forward.1} parent=43 // pred_region
        %p513 = scmp.lt.s32.totalorder %s16, 1
        %s514 = scalar_select %p513, %s16, 1
        %s515 = smul.addr %s514, 2
        %s516 = smul.addr %s515, 8
        %s517 = scalar_lea.vmem %s4, %s516
      $region48: #{conv_module_forward.1} parent=43 // pred_fallthru
        _
    $region44: #{conv_module_forward.1} parent=5 // pred_fallthru
      _
  $region6: #{conv_module_forward.1} parent=0 // loop_footer
    %s14 = sadd.s32 1, %s10
  $region7: #{conv_module_forward.1} parent=0 // loop_footer_branch
    %9 = sbr.rel target = $region3
  $region8: #{conv_module_forward.1} parent=0 // loop_exit
    _

</llo_original>
